<compile_context>
chip_gen: v6e
topology: v6e:2x2x1
jax: 0.10.0
libtpu: 0.0.40
codegen_flags: <defaults>
</compile_context>

<pallas_src>
import functools

import jax
import jax.numpy as jnp
from jax.experimental import pallas as pl
from jax.experimental.pallas import tpu as pltpu


def _round_up(x, m):
    return ((x + m - 1) // m) * m


def _cnn_kernel(x_ref, cw_ref, cb_ref, fw_ref, fb_ref, probs_ref, feat_ref,
                *, TB, Lp, L_out, K, E):
    # x_ref  : (TB, Lin_p, E) bf16  embedded tokens (token-0 padded past L)
    # cw_ref : (K, E, Fp)     bf16  conv weight, cw[dk, e, f] = conv_w[f, e, dk]
    # cb_ref : (1, Fp)        f32   conv bias (0 in padded filters)
    # fw_ref : (Fp, Cp)       bf16  fc weight (0 in padded rows/cols)
    # fb_ref : (1, Cp)        f32   fc bias (-1e30 in padded classes)
    # probs_ref: (TB, Cp) f32 ; feat_ref: (TB, Fp) f32
    Fp = cb_ref.shape[-1]

    # Conv1d as K accumulated tap matmuls on sublane-shifted views of the
    # embedded block (fused im2col: nothing K*E-wide ever touches HBM).
    acc = jnp.zeros((TB * Lp, Fp), jnp.float32)
    for dk in range(K):
        lhs = x_ref[:, pl.ds(dk, Lp), :].reshape(TB * Lp, E)
        acc = acc + jnp.dot(lhs, cw_ref[dk],
                            preferred_element_type=jnp.float32)
    acc = acc.reshape(TB, Lp, Fp)

    # Mask the padded time steps (t >= L_out: partial windows / padding) out
    # of the max with a cheap (1, Lp, Fp) additive mask.
    if Lp != L_out:
        t = jax.lax.broadcasted_iota(jnp.int32, (1, Lp, Fp), 1)
        acc = acc + jnp.where(t < L_out, jnp.float32(0.0), jnp.float32(-1e30))

    # Bias is time-invariant and ReLU is monotone -> hoist both past the max.
    feat = jnp.maximum(jnp.max(acc, axis=1) + cb_ref[...], 0.0)   # (TB, Fp)
    feat_ref[...] = feat

    # TODO(synk): F.dropout(p=0.5, training=True) is stochastic at train time;
    # eval-mode (identity) semantics are implemented here.

    # Linear + softmax(dim=1); padded classes carry -1e30 bias -> exp == 0.
    logits = jnp.dot(feat.astype(fw_ref.dtype), fw_ref[...],
                     preferred_element_type=jnp.float32) + fb_ref[...]
    m = jnp.max(logits, axis=-1, keepdims=True)
    e = jnp.exp(logits - m)
    inv = pl.reciprocal(jnp.sum(e, axis=-1, keepdims=True), approx=True)
    probs_ref[...] = e * inv


def cnn_forward(x_ids, emb_table, conv_w, conv_b, fc_w, fc_b, *, block_b=None):
    """Forward pass of the CNN text classifier.

    Args:
      x_ids:     (B, L) int32 token ids
      emb_table: (V, E) float32
      conv_w:    (F, E, K) float32  (PyTorch Conv1d layout)
      conv_b:    (F,)      float32
      fc_w:      (C, F)    float32  (PyTorch Linear layout)
      fc_b:      (C,)      float32
    Returns:
      (probs (B, C), feature_extracted (B, F))
    """
    B, L = x_ids.shape
    V, E = emb_table.shape
    F_, _, K = conv_w.shape
    C = fc_w.shape[0]
    L_out = L - K + 1
    if L_out <= 0:
        raise ValueError("sentence_len must be >= kernel_size")

    # ---- tiling / padding (8-aligned sublanes, 128-lane-dense outputs) ----
    Lp = _round_up(L_out, 8)              # conv output length, 8-aligned
    Lin_p = _round_up(Lp + K - 1, 8)      # input rows needed by the last tap
    Fp = _round_up(max(F_, 128), 128)
    Cp = _round_up(max(C, 128), 128)

    # Batch tile: >= 2 grid blocks when the batch allows it (v7x megacore),
    # then shrink until the estimated VMEM footprint fits the budget.
    if block_b is None:
        block_b = max(8, min(128, _round_up(pl.cdiv(_round_up(B, 8), 2), 8)))
    TB = _round_up(block_b, 8)

    def vmem_est(tb):
        lhs = 2 * tb * Lin_p * E * 2                       # input block x2 buffers
        wts = 2 * (K * E * Fp * 2 + Fp * Cp * 2 + (Fp + Cp) * 4)
        outs = 2 * tb * (Cp + Fp) * 4                      # outputs x2 buffers
        interm = tb * Lp * Fp * 4 + 2 * tb * Lp * E * 2    # f32 acc + shifted tap
        return lhs + wts + outs + interm

    VMEM_BUDGET = 26 << 20
    while TB > 8 and vmem_est(TB) > VMEM_BUDGET:
        TB = max(8, _round_up(TB // 2, 8))
    B_pad = _round_up(B, TB)
    vmem_limit = int(min(48 << 20,
                         max(32 << 20, _round_up(vmem_est(TB), 1 << 20) + (4 << 20))))

    # ---- glue (XLA): embedding gather only; im2col is fused in the kernel --
    # TODO(synk): the gather itself could also be fused (scalar-prefetched ids
    # + manual DMA row gather from emb_table left in HBM) to avoid one HBM
    # materialization of the (B, L, E) bf16 activations.
    ids_p = jnp.pad(x_ids, ((0, B_pad - B), (0, Lin_p - L)))       # pad with id 0
    x = jnp.take(emb_table.astype(jnp.bfloat16), ids_p, axis=0)    # (B_pad, Lin_p, E)

    # conv weight -> (K, E, Fp): cw[dk, e, f] = conv_w[f, e, dk]
    cw = jnp.transpose(conv_w, (2, 1, 0)).astype(jnp.bfloat16)
    cw = jnp.pad(cw, ((0, 0), (0, 0), (0, Fp - F_)))
    cb = jnp.pad(conv_b.astype(jnp.float32), (0, Fp - F_)).reshape(1, Fp)
    fw = jnp.pad(jnp.transpose(fc_w).astype(jnp.bfloat16),
                 ((0, Fp - F_), (0, Cp - C)))
    fb = jnp.pad(fc_b.astype(jnp.float32), (0, Cp - C),
                 constant_values=-1e30).reshape(1, Cp)

    kernel = functools.partial(_cnn_kernel, TB=TB, Lp=Lp, L_out=L_out, K=K, E=E)
    grid = B_pad // TB

    probs_p, feats_p = pl.pallas_call(
        kernel,
        out_shape=(
            jax.ShapeDtypeStruct((B_pad, Cp), jnp.float32),
            jax.ShapeDtypeStruct((B_pad, Fp), jnp.float32),
        ),
        grid_spec=pltpu.PrefetchScalarGridSpec(
            num_scalar_prefetch=0,
            grid=(grid,),
            in_specs=[
                pl.BlockSpec((TB, Lin_p, E), lambda b: (b, 0, 0)),  # embedded block
                pl.BlockSpec((K, E, Fp), lambda b: (0, 0, 0)),      # conv weight
                pl.BlockSpec((1, Fp), lambda b: (0, 0)),            # conv bias
                pl.BlockSpec((Fp, Cp), lambda b: (0, 0)),           # fc weight
                pl.BlockSpec((1, Cp), lambda b: (0, 0)),            # fc bias
            ],
            out_specs=[
                pl.BlockSpec((TB, Cp), lambda b: (b, 0)),
                pl.BlockSpec((TB, Fp), lambda b: (b, 0)),
            ],
        ),
        compiler_params=pltpu.CompilerParams(
            dimension_semantics=("parallel",),
            vmem_limit_bytes=vmem_limit),
    )(x, cw, cb, fw, fb)

    return probs_p[:B, :C], feats_p[:B, :F_]


def cnn_reference(x_ids, emb_table, conv_w, conv_b, fc_w, fc_b):
    """Pure-JAX f32 reference (mirrors the PyTorch forward, eval mode)."""
    emb = jnp.take(emb_table, x_ids, axis=0)                 # (B, L, E)
    F_, _, K = conv_w.shape
    L = emb.shape[1]
    L_out = L - K + 1
    acc = sum(jnp.einsum('ble,fe->blf', emb[:, dk:dk + L_out, :],
                         conv_w[:, :, dk]) for dk in range(K)) + conv_b
    act = jnp.maximum(acc, 0.0)
    feat = jnp.max(act, axis=1)                              # (B, F)
    logits = feat @ fc_w.T + fc_b
    return jax.nn.softmax(logits, axis=-1), feat


if __name__ == "__main__":
    # Small, deterministic configuration consistent with the module:
    #   kernel_sizes=[3], mode='static', ConvMethod='in_channel__is_embedding_dim'
    batch = 2
    vocab_size = 50
    embedding_dim = 32      # stands in for 300
    sentence_len = 16
    num_filters = 4         # stands in for 2 (same code path)
    kernel_size = 3
    num_classes = 3

    key = jax.random.PRNGKey(0)
    k_ids, k_emb, k_cw, k_cb, k_fw, k_fb = jax.random.split(key, 6)

    x_ids = jax.random.randint(k_ids, (batch, sentence_len), 0, vocab_size,
                               dtype=jnp.int32)
    emb_table = jax.random.normal(k_emb, (vocab_size, embedding_dim),
                                  dtype=jnp.float32) * 0.1
    conv_w = jax.random.normal(
        k_cw, (num_filters, embedding_dim, kernel_size), dtype=jnp.float32) * 0.1
    conv_b = jax.random.normal(k_cb, (num_filters,), dtype=jnp.float32) * 0.1
    fc_w = jax.random.normal(k_fw, (num_classes, num_filters),
                             dtype=jnp.float32) * 0.1
    fc_b = jax.random.normal(k_fb, (num_classes,), dtype=jnp.float32) * 0.1

    probs, feats = cnn_forward(x_ids, emb_table, conv_w, conv_b, fc_w, fc_b)
    jax.block_until_ready((probs, feats))

    # Sanity: shapes, softmax rows sum to ~1 (approx reciprocal), close to the
    # f32 reference (bf16 matmul operands -> generous tolerance).
    ref_probs, ref_feats = cnn_reference(x_ids, emb_table, conv_w, conv_b,
                                         fc_w, fc_b)
    assert probs.shape == (batch, num_classes)
    assert feats.shape == (batch, num_filters)
    assert bool(jnp.allclose(jnp.sum(probs, axis=1), 1.0, atol=2e-3))
    assert bool(jnp.max(jnp.abs(probs - ref_probs)) < 2e-2)
    assert bool(jnp.max(jnp.abs(feats - ref_feats)) < 2e-2)

    print("KERNEL_OK")
</pallas_src>

<mosaic_0001>
module attributes {stable_mosaic.version = 11 : i64} {
  func.func @_cnn_kernel(%arg0: i32, %arg1: memref<8x24x32xbf16, #tpu.memory_space<vmem>>, %arg2: memref<3x32x128xbf16, #tpu.memory_space<vmem>>, %arg3: memref<1x128xf32, #tpu.memory_space<vmem>>, %arg4: memref<128x128xbf16, #tpu.memory_space<vmem>>, %arg5: memref<1x128xf32, #tpu.memory_space<vmem>>, %arg6: memref<8x128xf32, #tpu.memory_space<vmem>>, %arg7: memref<8x128xf32, #tpu.memory_space<vmem>>) attributes {dimension_semantics = [#tpu.dimension_semantics<parallel>], iteration_bounds = array<i64: 1>, scalar_prefetch = 0 : i64, scratch_operands = 0 : i64, tpu.core_type = #tpu.core_type<tc>, window_params = [{transform_indices = @transform_0, window_bounds = array<i64: 8, 24, 32>}, {pipeline_mode = #tpu.pipeline_mode<synchronous>, transform_indices = @transform_1, window_bounds = array<i64: 3, 32, 128>}, {pipeline_mode = #tpu.pipeline_mode<synchronous>, transform_indices = @transform_2, window_bounds = array<i64: 1, 128>}, {pipeline_mode = #tpu.pipeline_mode<synchronous>, transform_indices = @transform_3, window_bounds = array<i64: 128, 128>}, {pipeline_mode = #tpu.pipeline_mode<synchronous>, transform_indices = @transform_4, window_bounds = array<i64: 1, 128>}, {transform_indices = @transform_5, window_bounds = array<i64: 8, 128>}, {transform_indices = @transform_6, window_bounds = array<i64: 8, 128>}]} {
    %cst = arith.constant 0.000000e+00 : f32
    %0 = vector.broadcast %cst : f32 to vector<128x128xf32>
    %c0 = arith.constant 0 : index
    %c0_0 = arith.constant 0 : index
    %c0_1 = arith.constant 0 : index
    %1 = vector.load %arg1[%c0, %c0_0, %c0_1] : memref<8x24x32xbf16, #tpu.memory_space<vmem>>, vector<8x16x32xbf16>
    %2 = vector.shape_cast %1 : vector<8x16x32xbf16> to vector<128x32xbf16>
    %c0_2 = arith.constant 0 : index
    %c0_3 = arith.constant 0 : index
    %c0_4 = arith.constant 0 : index
    %3 = vector.load %arg2[%c0_2, %c0_3, %c0_4] : memref<3x32x128xbf16, #tpu.memory_space<vmem>>, vector<1x32x128xbf16>
    %4 = vector.shape_cast %3 : vector<1x32x128xbf16> to vector<32x128xbf16>
    %cst_5 = arith.constant dense<0.000000e+00> : vector<128x128xf32>
    %5 = tpu.matmul %2, %4, %cst_5 {dimension_numbers = #tpu.dot_dimension_numbers<[1], [0], [0], [1], [0, 0, 1, 1], [], []>} : vector<128x32xbf16>, vector<32x128xbf16>, vector<128x128xf32> -> vector<128x128xf32>
    %6 = arith.addf %0, %5 : vector<128x128xf32>
    %c0_6 = arith.constant 0 : index
    %c1 = arith.constant 1 : index
    %c0_7 = arith.constant 0 : index
    %7 = vector.load %arg1[%c0_6, %c1, %c0_7] : memref<8x24x32xbf16, #tpu.memory_space<vmem>>, vector<8x16x32xbf16>
    %8 = vector.shape_cast %7 : vector<8x16x32xbf16> to vector<128x32xbf16>
    %c1_8 = arith.constant 1 : index
    %c0_9 = arith.constant 0 : index
    %c0_10 = arith.constant 0 : index
    %9 = vector.load %arg2[%c1_8, %c0_9, %c0_10] : memref<3x32x128xbf16, #tpu.memory_space<vmem>>, vector<1x32x128xbf16>
    %10 = vector.shape_cast %9 : vector<1x32x128xbf16> to vector<32x128xbf16>
    %cst_11 = arith.constant dense<0.000000e+00> : vector<128x128xf32>
    %11 = tpu.matmul %8, %10, %cst_11 {dimension_numbers = #tpu.dot_dimension_numbers<[1], [0], [0], [1], [0, 0, 1, 1], [], []>} : vector<128x32xbf16>, vector<32x128xbf16>, vector<128x128xf32> -> vector<128x128xf32>
    %12 = arith.addf %6, %11 : vector<128x128xf32>
    %c0_12 = arith.constant 0 : index
    %c2 = arith.constant 2 : index
    %c0_13 = arith.constant 0 : index
    %13 = vector.load %arg1[%c0_12, %c2, %c0_13] : memref<8x24x32xbf16, #tpu.memory_space<vmem>>, vector<8x16x32xbf16>
    %14 = vector.shape_cast %13 : vector<8x16x32xbf16> to vector<128x32xbf16>
    %c2_14 = arith.constant 2 : index
    %c0_15 = arith.constant 0 : index
    %c0_16 = arith.constant 0 : index
    %15 = vector.load %arg2[%c2_14, %c0_15, %c0_16] : memref<3x32x128xbf16, #tpu.memory_space<vmem>>, vector<1x32x128xbf16>
    %16 = vector.shape_cast %15 : vector<1x32x128xbf16> to vector<32x128xbf16>
    %cst_17 = arith.constant dense<0.000000e+00> : vector<128x128xf32>
    %17 = tpu.matmul %14, %16, %cst_17 {dimension_numbers = #tpu.dot_dimension_numbers<[1], [0], [0], [1], [0, 0, 1, 1], [], []>} : vector<128x32xbf16>, vector<32x128xbf16>, vector<128x128xf32> -> vector<128x128xf32>
    %18 = arith.addf %12, %17 : vector<128x128xf32>
    %19 = vector.shape_cast %18 : vector<128x128xf32> to vector<8x16x128xf32>
    %20 = tpu.iota {dimensions = array<i32: 1>} : vector<1x16x128xi32>
    %c14_i32 = arith.constant 14 : i32
    %21 = vector.broadcast %c14_i32 : i32 to vector<1x16x128xi32>
    %22 = arith.cmpi slt, %20, %21 : vector<1x16x128xi32>
    %cst_18 = arith.constant 0.000000e+00 : f32
    %cst_19 = arith.constant -1.000000e+30 : f32
    %23 = vector.broadcast %cst_18 : f32 to vector<1x16x128xf32>
    %24 = vector.broadcast %cst_19 : f32 to vector<1x16x128xf32>
    %25 = arith.select %22, %23, %24 : vector<1x16x128xi1>, vector<1x16x128xf32>
    %26 = vector.broadcast %25 : vector<1x16x128xf32> to vector<8x16x128xf32>
    %27 = arith.addf %19, %26 : vector<8x16x128xf32>
    %cst_20 = arith.constant dense<0xFF800000> : vector<8x128xf32>
    %28 = vector.multi_reduction <maximumf>, %27, %cst_20 [1] : vector<8x16x128xf32> to vector<8x128xf32>
    %c0_21 = arith.constant 0 : index
    %c0_22 = arith.constant 0 : index
    %29 = vector.load %arg3[%c0_21, %c0_22] : memref<1x128xf32, #tpu.memory_space<vmem>>, vector<1x128xf32>
    %30 = vector.broadcast %29 : vector<1x128xf32> to vector<8x128xf32>
    %31 = arith.addf %28, %30 : vector<8x128xf32>
    %cst_23 = arith.constant 0.000000e+00 : f32
    %32 = vector.broadcast %cst_23 : f32 to vector<8x128xf32>
    %33 = arith.maximumf %31, %32 : vector<8x128xf32>
    %c0_24 = arith.constant 0 : index
    %c0_25 = arith.constant 0 : index
    %34 = vector.load %arg7[%c0_24, %c0_25] : memref<8x128xf32, #tpu.memory_space<vmem>>, vector<8x128xf32>
    tpu.vector_store %arg7[%c0_24, %c0_25], %33 {strides = array<i32>} : memref<8x128xf32, #tpu.memory_space<vmem>>, vector<8x128xf32>,
    %35 = arith.truncf %33 : vector<8x128xf32> to vector<8x128xbf16>
    %c0_26 = arith.constant 0 : index
    %c0_27 = arith.constant 0 : index
    %36 = vector.load %arg4[%c0_26, %c0_27] : memref<128x128xbf16, #tpu.memory_space<vmem>>, vector<128x128xbf16>
    %cst_28 = arith.constant dense<0.000000e+00> : vector<8x128xf32>
    %37 = tpu.matmul %35, %36, %cst_28 {dimension_numbers = #tpu.dot_dimension_numbers<[1], [0], [0], [1], [0, 0, 1, 1], [], []>} : vector<8x128xbf16>, vector<128x128xbf16>, vector<8x128xf32> -> vector<8x128xf32>
    %c0_29 = arith.constant 0 : index
    %c0_30 = arith.constant 0 : index
    %38 = vector.load %arg5[%c0_29, %c0_30] : memref<1x128xf32, #tpu.memory_space<vmem>>, vector<1x128xf32>
    %39 = vector.broadcast %38 : vector<1x128xf32> to vector<8x128xf32>
    %40 = arith.addf %37, %39 : vector<8x128xf32>
    %cst_31 = arith.constant dense<0xFF800000> : vector<8xf32>
    %41 = vector.multi_reduction <maximumf>, %40, %cst_31 [1] : vector<8x128xf32> to vector<8xf32>
    %42 = vector.shape_cast %41 : vector<8xf32> to vector<8x1xf32>
    %43 = vector.broadcast %42 : vector<8x1xf32> to vector<8x128xf32>
    %44 = arith.subf %40, %43 : vector<8x128xf32>
    %45 = math.exp %44 : vector<8x128xf32>
    %cst_32 = arith.constant dense<0.000000e+00> : vector<8xf32>
    %46 = vector.multi_reduction <add>, %45, %cst_32 [1] : vector<8x128xf32> to vector<8xf32>
    %47 = vector.shape_cast %46 : vector<8xf32> to vector<8x1xf32>
    %48 = tpu.reciprocal %47 {approx = true} : vector<8x1xf32> -> vector<8x1xf32>
    %49 = vector.broadcast %48 : vector<8x1xf32> to vector<8x128xf32>
    %50 = arith.mulf %45, %49 : vector<8x128xf32>
    %c0_33 = arith.constant 0 : index
    %c0_34 = arith.constant 0 : index
    %51 = vector.load %arg6[%c0_33, %c0_34] : memref<8x128xf32, #tpu.memory_space<vmem>>, vector<8x128xf32>
    tpu.vector_store %arg6[%c0_33, %c0_34], %50 {strides = array<i32>} : memref<8x128xf32, #tpu.memory_space<vmem>>, vector<8x128xf32>,
    return
  }
  func.func @transform_0(%arg0: i32) -> (i32, i32, i32) {
    %c0_i32 = arith.constant 0 : i32
    %c0_i32_0 = arith.constant 0 : i32
    %c0_i32_1 = arith.constant 0 : i32
    return %arg0, %c0_i32, %c0_i32_0 : i32, i32, i32
  }
  func.func @transform_1(%arg0: i32) -> (i32, i32, i32) {
    %c0_i32 = arith.constant 0 : i32
    %c0_i32_0 = arith.constant 0 : i32
    %c0_i32_1 = arith.constant 0 : i32
    %c0_i32_2 = arith.constant 0 : i32
    return %c0_i32, %c0_i32_0, %c0_i32_1 : i32, i32, i32
  }
  func.func @transform_2(%arg0: i32) -> (i32, i32) {
    %c0_i32 = arith.constant 0 : i32
    %c0_i32_0 = arith.constant 0 : i32
    %c0_i32_1 = arith.constant 0 : i32
    return %c0_i32, %c0_i32_0 : i32, i32
  }
  func.func @transform_3(%arg0: i32) -> (i32, i32) {
    %c0_i32 = arith.constant 0 : i32
    %c0_i32_0 = arith.constant 0 : i32
    %c0_i32_1 = arith.constant 0 : i32
    return %c0_i32, %c0_i32_0 : i32, i32
  }
  func.func @transform_4(%arg0: i32) -> (i32, i32) {
    %c0_i32 = arith.constant 0 : i32
    %c0_i32_0 = arith.constant 0 : i32
    %c0_i32_1 = arith.constant 0 : i32
    return %c0_i32, %c0_i32_0 : i32, i32
  }
  func.func @transform_5(%arg0: i32) -> (i32, i32) {
    %c0_i32 = arith.constant 0 : i32
    %c0_i32_0 = arith.constant 0 : i32
    return %arg0, %c0_i32 : i32, i32
  }
  func.func @transform_6(%arg0: i32) -> (i32, i32) {
    %c0_i32 = arith.constant 0 : i32
    %c0_i32_0 = arith.constant 0 : i32
    return %arg0, %c0_i32 : i32, i32
  }
}

</mosaic_0001>

<llo_original>
// kernel: tpu_custom_call.1
$region0: #{tpu_custom_call.1}
  #allocation0 [shape = 'u32[]', space=smem, size = 0x4, offset = 0x4, fixed_abs, tag = 'smem constant byte address 0x4 - core index']
  #allocation1 [shape = 'u32[144,128]{1,0:T(1,128)}', space=vmem, size = 0x12000, scoped, tag = 'internal scratch']
  %s0 = inlined_call_operand.hbm [shape: bf16[8,24,32], index: 0, kind: input, shape index: {}]
  %s1 = inlined_call_operand.hbm [shape: bf16[3,32,128], index: 1, kind: input, shape index: {}]
  %s2 = inlined_call_operand.vmem [shape: f32[1,128], index: 2, kind: input, shape index: {}]
  %s3 = inlined_call_operand.hbm [shape: bf16[128,128], index: 3, kind: input, shape index: {}]
  %s4 = inlined_call_operand.vmem [shape: f32[1,128], index: 4, kind: input, shape index: {}]
  %s5 = inlined_call_operand.hbm [shape: f32[8,128], index: 5, kind: output, shape index: {0}]
  %s6 = inlined_call_operand.hbm [shape: f32[8,128], index: 6, kind: output, shape index: {1}]
  %7 = xla_tuple %s5, %s6
  %s8 = sld [smem:[#allocation0]]
  $region50: #{tpu_custom_call.1} parent=0
    _
  %s10 = ssub.s32 1, %s8
  %s11 = scalar_select 0, %s10, %s8
  $region1: #{tpu_custom_call.1} parent=0
    #allocation2 [shape = 'u8[49152]{0}', space=vmem, size = 0xc000, scoped, tag = 'input window, operand 0, single buffered']
    #allocation3 [shape = 's32[1]{0}', space=sflag, size = 0x4, scoped, tag = 'scoped memory for tpu_custom_call.1']
    #allocation4 [shape = 's32[1]{0}', space=sflag, size = 0x4, scoped, tag = 'scoped memory for tpu_custom_call.1']
    #allocation5 [shape = 'u8[24576]{0}', space=vmem, size = 0x6000, scoped, tag = 'input window, operand 1, single buffered']
    #allocation6 [shape = 's32[1]{0}', space=sflag, size = 0x4, scoped, tag = 'scoped memory for tpu_custom_call.1']
    #allocation7 [shape = 'u8[32768]{0}', space=vmem, size = 0x8000, scoped, tag = 'input window, operand 3, single buffered']
    #allocation8 [shape = 'u8[4096]{0}', space=vmem, size = 0x1000, scoped, tag = 'output window, operand 0, single buffered']
    #allocation9 [shape = 'u8[4096]{0}', space=vmem, size = 0x1000, scoped, tag = 'output window, operand 1, single buffered']
    #allocation10 [shape = 's32[1]{0}', space=sflag, size = 0x4, scoped, tag = 'scoped memory for tpu_custom_call.1']
    %12 = vsyncpa [#allocation3], 0
    %13 = vsyncpa [#allocation6], 0
    %14 = vsyncpa [#allocation4], 0
    %15 = vsyncpa [#allocation10], 0
    // Predicated region
    $region2: #{tpu_custom_call.1} parent=1 // pred_check
      _
    $region3: #{tpu_custom_call.1} parent=1 // pred_check_branch
      %17 = sbr.rel (0) target = $region5
    $region4: #{tpu_custom_call.1} parent=1 // pred_region
      %s19 = ssub.s32 1536, 1536
      %20 = vsyncadd [#allocation3], %s19
      %s21 = sshll.u32 [#allocation2], 4
      %s22 = int_to_ptr.vmem [resolvable:$true] %s21
      %27 = dma.hbm_to_vmem [thread:$0]  %s0, 1536, %s22, [#allocation3], 64, 64, 4
    $region5: #{tpu_custom_call.1} parent=1 // pred_fallthru
      _
    // Predicated region
    $region6: #{tpu_custom_call.1} parent=1 // pred_check
      _
    $region7: #{tpu_custom_call.1} parent=1 // pred_check_branch
      %29 = sbr.rel (0) target = $region9
    $region8: #{tpu_custom_call.1} parent=1 // pred_region
      %s31 = ssub.s32 768, 768
      %32 = vsyncadd [#allocation6], %s31
      %s33 = sshll.u32 [#allocation5], 4
      %s34 = int_to_ptr.vmem [resolvable:$true] %s33
      %39 = dma.hbm_to_vmem [thread:$0]  %s1, 768, %s34, [#allocation6], 64, 64, 4
    $region9: #{tpu_custom_call.1} parent=1 // pred_fallthru
      _
    // Predicated region
    $region10: #{tpu_custom_call.1} parent=1 // pred_check
      _
    $region11: #{tpu_custom_call.1} parent=1 // pred_check_branch
      %41 = sbr.rel (0) target = $region13
    $region12: #{tpu_custom_call.1} parent=1 // pred_region
      _
    $region13: #{tpu_custom_call.1} parent=1 // pred_fallthru
      _
    // Predicated region
    $region14: #{tpu_custom_call.1} parent=1 // pred_check
      _
    $region15: #{tpu_custom_call.1} parent=1 // pred_check_branch
      %43 = sbr.rel (0) target = $region17
    $region16: #{tpu_custom_call.1} parent=1 // pred_region
      %s45 = ssub.s32 1024, 1024
      %46 = vsyncadd [#allocation6], %s45
      %s47 = sshll.u32 [#allocation7], 4
      %s48 = int_to_ptr.vmem [resolvable:$true] %s47
      %53 = dma.hbm_to_vmem [thread:$0]  %s3, 1024, %s48, [#allocation6], 64, 64, 4
    $region17: #{tpu_custom_call.1} parent=1 // pred_fallthru
      _
    // Predicated region
    $region18: #{tpu_custom_call.1} parent=1 // pred_check
      _
    $region19: #{tpu_custom_call.1} parent=1 // pred_check_branch
      %55 = sbr.rel (0) target = $region21
    $region20: #{tpu_custom_call.1} parent=1 // pred_region
      _
    $region21: #{tpu_custom_call.1} parent=1 // pred_fallthru
      _
    // Predicated region
    $region22: #{tpu_custom_call.1} parent=1 // pred_check
      _
    $region23: #{tpu_custom_call.1} parent=1 // pred_check_branch
      %57 = sbr.rel (0) target = $region25
    $region24: #{tpu_custom_call.1} parent=1 // pred_region
      %58 = dma.done [#allocation3], 1536
    $region25: #{tpu_custom_call.1} parent=1 // pred_fallthru
      _
    // Predicated region
    $region26: #{tpu_custom_call.1} parent=1 // pred_check
      _
    $region27: #{tpu_custom_call.1} parent=1 // pred_check_branch
      %60 = sbr.rel (0) target = $region29
    $region28: #{tpu_custom_call.1} parent=1 // pred_region
      %61 = dma.done [#allocation6], 768
    $region29: #{tpu_custom_call.1} parent=1 // pred_fallthru
      _
    // Predicated region
    $region30: #{tpu_custom_call.1} parent=1 // pred_check
      _
    $region31: #{tpu_custom_call.1} parent=1 // pred_check_branch
      %63 = sbr.rel (0) target = $region33
    $region32: #{tpu_custom_call.1} parent=1 // pred_region
      %64 = dma.done [#allocation6], 1024
    $region33: #{tpu_custom_call.1} parent=1 // pred_fallthru
      _
    %v66 = vld [vmem:[#allocation2] sm:$0xf]
    %v67 = vld [vmem:[#allocation2 + $0x4] sm:$0xf]
    %v68 = vld [vmem:[#allocation2 + $0xc] sm:$0xf]
    %v69 = vld [vmem:[#allocation2 + $0x10] sm:$0xf]
    %v70 = vld [vmem:[#allocation2 + $0x18] sm:$0xf]
    %v71 = vld [vmem:[#allocation2 + $0x1c] sm:$0xf]
    %v72 = vld [vmem:[#allocation2 + $0x24] sm:$0xf]
    %v73 = vld [vmem:[#allocation2 + $0x28] sm:$0xf]
    %v74 = vld [vmem:[#allocation2 + $0x30] sm:$0xf]
    %v75 = vld [vmem:[#allocation2 + $0x34] sm:$0xf]
    %v76 = vld [vmem:[#allocation2 + $0x3c] sm:$0xf]
    %v77 = vld [vmem:[#allocation2 + $0x40] sm:$0xf]
    %v78 = vld [vmem:[#allocation2 + $0x48] sm:$0xf]
    %v79 = vld [vmem:[#allocation2 + $0x4c] sm:$0xf]
    %v80 = vld [vmem:[#allocation2 + $0x54] sm:$0xf]
    %v81 = vld [vmem:[#allocation2 + $0x58] sm:$0xf]
    %v82 = vld [vmem:[#allocation5] sm:$0xf]
    %v83 = vld [vmem:[#allocation5 + $0x4] sm:$0xf]
    %v84 = vld [vmem:[#allocation5 + $0x8] sm:$0xf]
    %v85 = vld [vmem:[#allocation5 + $0xc] sm:$0xf]
    %v86 = vld [vmem:[#allocation2 + $0x8] sm:$0x1]
    %v87 = vld [vmem:[#allocation2 + $0x14] sm:$0x1]
    %v88 = vld [vmem:[#allocation2 + $0x20] sm:$0x1]
    %v89 = vld [vmem:[#allocation2 + $0x2c] sm:$0x1]
    %v90 = vld [vmem:[#allocation2 + $0x38] sm:$0x1]
    %v91 = vld [vmem:[#allocation2 + $0x44] sm:$0x1]
    %v92 = vld [vmem:[#allocation2 + $0x50] sm:$0x1]
    %v93 = vld [vmem:[#allocation2 + $0x5c] sm:$0x1]
    %vm94 = vsmask.f32 3328
    %vm95 = vsmask.f32 7440
    %vm96 = vmor %vm94, %vm95
    %v98 = vshrl.u32 %v66, 16
    %v100 = vrot.slane %v98, 4
    %v101 = vshll.u32 %v66, 16
    %v103 = vrot.slane %v101, 5
    %v104 = vor.u32 %v100, %v103
    %v105 = vrot.slane %v104, 4
    %v107 = vshll.u32 %v67, 16
    %v109 = vrot.slane %v107, 5
    %v110 = vsel %vm96, %v105, %v109
    %v111 = vshrl.u32 %v67, 16
    %v113 = vrot.slane %v111, 4
    %v114 = vor.u32 %v113, %v109
    %v115 = vrot.slane %v114, 4
    %v117 = vshll.u32 %v86, 16
    %v119 = vrot.slane %v117, 5
    %v120 = vsel %vm96, %v115, %v119
    %v122 = vshrl.u32 %v68, 16
    %v124 = vrot.slane %v122, 4
    %v125 = vshll.u32 %v68, 16
    %v127 = vrot.slane %v125, 5
    %v128 = vor.u32 %v124, %v127
    %v129 = vrot.slane %v128, 4
    %v131 = vshll.u32 %v69, 16
    %v133 = vrot.slane %v131, 5
    %v134 = vsel %vm96, %v129, %v133
    %v135 = vshrl.u32 %v69, 16
    %v137 = vrot.slane %v135, 4
    %v138 = vor.u32 %v137, %v133
    %v139 = vrot.slane %v138, 4
    %v141 = vshll.u32 %v87, 16
    %v143 = vrot.slane %v141, 5
    %v144 = vsel %vm96, %v139, %v143
    %v146 = vshrl.u32 %v70, 16
    %v148 = vrot.slane %v146, 4
    %v149 = vshll.u32 %v70, 16
    %v151 = vrot.slane %v149, 5
    %v152 = vor.u32 %v148, %v151
    %v153 = vrot.slane %v152, 4
    %v155 = vshll.u32 %v71, 16
    %v157 = vrot.slane %v155, 5
    %v158 = vsel %vm96, %v153, %v157
    %v159 = vshrl.u32 %v71, 16
    %v161 = vrot.slane %v159, 4
    %v162 = vor.u32 %v161, %v157
    %v163 = vrot.slane %v162, 4
    %v165 = vshll.u32 %v88, 16
    %v167 = vrot.slane %v165, 5
    %v168 = vsel %vm96, %v163, %v167
    %v170 = vshrl.u32 %v72, 16
    %v172 = vrot.slane %v170, 4
    %v173 = vshll.u32 %v72, 16
    %v175 = vrot.slane %v173, 5
    %v176 = vor.u32 %v172, %v175
    %v177 = vrot.slane %v176, 4
    %v179 = vshll.u32 %v73, 16
    %v181 = vrot.slane %v179, 5
    %v182 = vsel %vm96, %v177, %v181
    %v183 = vshrl.u32 %v73, 16
    %v185 = vrot.slane %v183, 4
    %v186 = vor.u32 %v185, %v181
    %v187 = vrot.slane %v186, 4
    %v189 = vshll.u32 %v89, 16
    %v191 = vrot.slane %v189, 5
    %v192 = vsel %vm96, %v187, %v191
    %v194 = vshrl.u32 %v74, 16
    %v196 = vrot.slane %v194, 4
    %v197 = vshll.u32 %v74, 16
    %v199 = vrot.slane %v197, 5
    %v200 = vor.u32 %v196, %v199
    %v201 = vrot.slane %v200, 4
    %v203 = vshll.u32 %v75, 16
    %v205 = vrot.slane %v203, 5
    %v206 = vsel %vm96, %v201, %v205
    %v207 = vshrl.u32 %v75, 16
    %v209 = vrot.slane %v207, 4
    %v210 = vor.u32 %v209, %v205
    %v211 = vrot.slane %v210, 4
    %v213 = vshll.u32 %v90, 16
    %v215 = vrot.slane %v213, 5
    %v216 = vsel %vm96, %v211, %v215
    %v218 = vshrl.u32 %v76, 16
    %v220 = vrot.slane %v218, 4
    %v221 = vshll.u32 %v76, 16
    %v223 = vrot.slane %v221, 5
    %v224 = vor.u32 %v220, %v223
    %v225 = vrot.slane %v224, 4
    %v227 = vshll.u32 %v77, 16
    %v229 = vrot.slane %v227, 5
    %v230 = vsel %vm96, %v225, %v229
    %v231 = vshrl.u32 %v77, 16
    %v233 = vrot.slane %v231, 4
    %v234 = vor.u32 %v233, %v229
    %v235 = vrot.slane %v234, 4
    %v237 = vshll.u32 %v91, 16
    %v239 = vrot.slane %v237, 5
    %v240 = vsel %vm96, %v235, %v239
    %v242 = vshrl.u32 %v78, 16
    %v244 = vrot.slane %v242, 4
    %v245 = vshll.u32 %v78, 16
    %v247 = vrot.slane %v245, 5
    %v248 = vor.u32 %v244, %v247
    %v249 = vrot.slane %v248, 4
    %v251 = vshll.u32 %v79, 16
    %v253 = vrot.slane %v251, 5
    %v254 = vsel %vm96, %v249, %v253
    %v255 = vshrl.u32 %v79, 16
    %v257 = vrot.slane %v255, 4
    %v258 = vor.u32 %v257, %v253
    %v259 = vrot.slane %v258, 4
    %v261 = vshll.u32 %v92, 16
    %v263 = vrot.slane %v261, 5
    %v264 = vsel %vm96, %v259, %v263
    %v266 = vshrl.u32 %v80, 16
    %v268 = vrot.slane %v266, 4
    %v269 = vshll.u32 %v80, 16
    %v271 = vrot.slane %v269, 5
    %v272 = vor.u32 %v268, %v271
    %v273 = vrot.slane %v272, 4
    %v275 = vshll.u32 %v81, 16
    %v277 = vrot.slane %v275, 5
    %v278 = vsel %vm96, %v273, %v277
    %v279 = vshrl.u32 %v81, 16
    %v281 = vrot.slane %v279, 4
    %v282 = vor.u32 %v281, %v277
    %v283 = vrot.slane %v282, 4
    %v285 = vshll.u32 %v93, 16
    %v287 = vrot.slane %v285, 5
    %v288 = vsel %vm96, %v283, %v287
    %s289 = scalar_lea.vmem [#allocation5], 16
    %v290 = vld [vmem:[%s289] sm:$0xf]
    %v291 = vld [vmem:[%s289 + $0x4] sm:$0xf]
    %v292 = vld [vmem:[%s289 + $0x8] sm:$0xf]
    %v293 = vld [vmem:[%s289 + $0xc] sm:$0xf]
    %v294 = vunpack.c.l.b16 %v110
    %v295 = vunpack.c.l.b16 %v120
    %v296 = vunpack.c.l.b16 %v134
    %v297 = vunpack.c.l.b16 %v144
    %v298 = vunpack.c.l.b16 %v158
    %v299 = vunpack.c.l.b16 %v168
    %v300 = vunpack.c.l.b16 %v182
    %v301 = vunpack.c.l.b16 %v192
    %v302 = vunpack.c.l.b16 %v206
    %v303 = vunpack.c.l.b16 %v216
    %v304 = vunpack.c.l.b16 %v230
    %v305 = vunpack.c.l.b16 %v240
    %v306 = vunpack.c.l.b16 %v254
    %v307 = vunpack.c.l.b16 %v264
    %v308 = vunpack.c.l.b16 %v278
    %v309 = vunpack.c.l.b16 %v288
    %v310 = vpack.c.b16 %v295, %v294
    %v311 = vpack.c.b16 %v297, %v296
    %v312 = vpack.c.b16 %v299, %v298
    %v313 = vpack.c.b16 %v301, %v300
    %v314 = vpack.c.b16 %v303, %v302
    %v315 = vpack.c.b16 %v305, %v304
    %v316 = vpack.c.b16 %v307, %v306
    %v317 = vpack.c.b16 %v309, %v308
    %v322 = vunpack.c.l.b16 %v290
    %v323 = vunpack.c.l.b16 %v291
    %v324 = vunpack.c.l.b16 %v292
    %v325 = vunpack.c.l.b16 %v293
    %v326 = vpack.c.b16 %v323, %v322
    %v327 = vpack.c.b16 %v325, %v324
    %vm330 = vcmask 261120
    %v332 = vsel %vm330, %v310, 0
    %v335 = vsel %vm330, %v311, 0
    %v338 = vsel %vm330, %v312, 0
    %v341 = vsel %vm330, %v313, 0
    %v344 = vsel %vm330, %v314, 0
    %v347 = vsel %vm330, %v315, 0
    %v350 = vsel %vm330, %v316, 0
    %v353 = vsel %vm330, %v317, 0
    %355 = vmatprep.subr.bf16.mxu0 0
    %356 = vmatpush1.bf16.msra.mxu0 0
    %357 = vmatprep.subr.bf16.mxu0 0
    %358 = vmatpush1.bf16.msra.mxu0 0
    %359 = vmatprep.subr.bf16.mxu0 0
    %360 = vmatpush1.bf16.msra.mxu0 0
    %361 = vmatprep.subr.bf16.mxu0 0
    %362 = vmatpush1.bf16.msra.mxu0 0
    %363 = vmatprep.subr.bf16.mxu0 0
    %364 = vmatpush1.bf16.msra.mxu0 0
    %365 = vmatprep.subr.bf16.mxu0 0
    %366 = vmatpush1.bf16.msra.mxu0 0
    %367 = vmatprep.subr.bf16.mxu0 0
    %368 = vmatpush1.bf16.msra.mxu0 %v327
    %369 = vmatprep.subr.bf16.mxu0 0
    %370 = vmatpush1.bf16.msra.mxu0 %v326
    %371 = vmatprep.subr.bf16.mxu0 0
    %372 = vmatpush2.bf16.msra.mxu0 0
    %373 = vmatprep.subr.bf16.mxu0 0
    %374 = vmatpush2.bf16.msra.mxu0 0
    %375 = vmatprep.subr.bf16.mxu0 0
    %376 = vmatpush2.bf16.msra.mxu0 0
    %377 = vmatprep.subr.bf16.mxu0 0
    %378 = vmatpush2.bf16.msra.mxu0 0
    %379 = vmatprep.subr.bf16.mxu0 0
    %380 = vmatpush2.bf16.msra.mxu0 0
    %381 = vmatprep.subr.bf16.mxu0 0
    %382 = vmatpush2.bf16.msra.mxu0 0
    %383 = vmatprep.subr.bf16.mxu0 0
    %384 = vmatpush2.bf16.msra.mxu0 0
    %385 = vmatprep.subr.bf16.mxu0 0
    %386 = vmatpush2.bf16.msra.mxu0 0
    %387 = vmatprep.mubr.bf16.mxu0 0
    %388 = vmatmul.mubr.bf16.gmra.mxu0 %v332
    %v389 = vpop.f32.mrf.mxu0
    %v390 = vadd.f32 0.0, %v389
    %v391 = vpop.f32.mrf.mxu0
    %v392 = vpop.f32.mrf.mxu0
    %v393 = vadd.f32 0.0, %v392
    %v394 = vpop.f32.mrf.mxu0
    %395 = vmatprep.mubr.bf16.mxu0 0
    %396 = vmatmul.mubr.bf16.gmra.mxu0 %v335
    %v397 = vpop.f32.mrf.mxu0
    %v398 = vadd.f32 0.0, %v397
    %v399 = vpop.f32.mrf.mxu0
    %v400 = vpop.f32.mrf.mxu0
    %v401 = vadd.f32 0.0, %v400
    %v402 = vpop.f32.mrf.mxu0
    %403 = vmatprep.mubr.bf16.mxu0 0
    %404 = vmatmul.mubr.bf16.gmra.mxu0 %v338
    %v405 = vpop.f32.mrf.mxu0
    %v406 = vadd.f32 0.0, %v405
    %v407 = vpop.f32.mrf.mxu0
    %v408 = vpop.f32.mrf.mxu0
    %v409 = vadd.f32 0.0, %v408
    %v410 = vpop.f32.mrf.mxu0
    %411 = vmatprep.mubr.bf16.mxu0 0
    %412 = vmatmul.mubr.bf16.gmra.mxu0 %v341
    %v413 = vpop.f32.mrf.mxu0
    %v414 = vadd.f32 0.0, %v413
    %v415 = vpop.f32.mrf.mxu0
    %v416 = vpop.f32.mrf.mxu0
    %v417 = vadd.f32 0.0, %v416
    %v418 = vpop.f32.mrf.mxu0
    %419 = vmatprep.mubr.bf16.mxu0 0
    %420 = vmatmul.mubr.bf16.gmra.mxu0 %v344
    %v421 = vpop.f32.mrf.mxu0
    %v422 = vadd.f32 0.0, %v421
    %v423 = vpop.f32.mrf.mxu0
    %v424 = vpop.f32.mrf.mxu0
    %v425 = vadd.f32 0.0, %v424
    %v426 = vpop.f32.mrf.mxu0
    %427 = vmatprep.mubr.bf16.mxu0 0
    %428 = vmatmul.mubr.bf16.gmra.mxu0 %v347
    %v429 = vpop.f32.mrf.mxu0
    %v430 = vadd.f32 0.0, %v429
    %v431 = vpop.f32.mrf.mxu0
    %v432 = vpop.f32.mrf.mxu0
    %v433 = vadd.f32 0.0, %v432
    %v434 = vpop.f32.mrf.mxu0
    %435 = vmatprep.mubr.bf16.mxu0 0
    %436 = vmatmul.mubr.bf16.gmra.mxu0 %v350
    %v437 = vpop.f32.mrf.mxu0
    %v438 = vadd.f32 0.0, %v437
    %v439 = vpop.f32.mrf.mxu0
    %v440 = vpop.f32.mrf.mxu0
    %v441 = vadd.f32 0.0, %v440
    %v442 = vpop.f32.mrf.mxu0
    %443 = vmatprep.mubr.bf16.mxu0 0
    %444 = vmatmul.mubr.bf16.gmra.mxu0 %v353
    %v445 = vpop.f32.mrf.mxu0
    %v446 = vadd.f32 0.0, %v445
    %v447 = vpop.f32.mrf.mxu0
    %v448 = vpop.f32.mrf.mxu0
    %v449 = vadd.f32 0.0, %v448
    %v450 = vpop.f32.mrf.mxu0
    %451 = vdwg.mxu0
    %v468 = vunpack.c.l.b16 %v66
    %v469 = vunpack.c.l.b16 %v67
    %v470 = vunpack.c.l.b16 %v68
    %v471 = vunpack.c.l.b16 %v69
    %v472 = vunpack.c.l.b16 %v70
    %v473 = vunpack.c.l.b16 %v71
    %v474 = vunpack.c.l.b16 %v72
    %v475 = vunpack.c.l.b16 %v73
    %v476 = vunpack.c.l.b16 %v74
    %v477 = vunpack.c.l.b16 %v75
    %v478 = vunpack.c.l.b16 %v76
    %v479 = vunpack.c.l.b16 %v77
    %v480 = vunpack.c.l.b16 %v78
    %v481 = vunpack.c.l.b16 %v79
    %v482 = vunpack.c.l.b16 %v80
    %v483 = vunpack.c.l.b16 %v81
    %v484 = vpack.c.b16 %v469, %v468
    %v485 = vpack.c.b16 %v471, %v470
    %v486 = vpack.c.b16 %v473, %v472
    %v487 = vpack.c.b16 %v475, %v474
    %v488 = vpack.c.b16 %v477, %v476
    %v489 = vpack.c.b16 %v479, %v478
    %v490 = vpack.c.b16 %v481, %v480
    %v491 = vpack.c.b16 %v483, %v482
    %v496 = vunpack.c.l.b16 %v82
    %v497 = vunpack.c.l.b16 %v83
    %v498 = vunpack.c.l.b16 %v84
    %v499 = vunpack.c.l.b16 %v85
    %v500 = vpack.c.b16 %v497, %v496
    %v501 = vpack.c.b16 %v499, %v498
    %v505 = vsel %vm330, %v484, 0
    %v508 = vsel %vm330, %v485, 0
    %v511 = vsel %vm330, %v486, 0
    %v514 = vsel %vm330, %v487, 0
    %v517 = vsel %vm330, %v488, 0
    %v520 = vsel %vm330, %v489, 0
    %v523 = vsel %vm330, %v490, 0
    %v526 = vsel %vm330, %v491, 0
    %528 = vmatprep.subr.bf16.mxu0 0
    %529 = vmatpush1.bf16.msra.mxu0 0
    %530 = vmatprep.subr.bf16.mxu0 0
    %531 = vmatpush1.bf16.msra.mxu0 0
    %532 = vmatprep.subr.bf16.mxu0 0
    %533 = vmatpush1.bf16.msra.mxu0 0
    %534 = vmatprep.subr.bf16.mxu0 0
    %535 = vmatpush1.bf16.msra.mxu0 0
    %536 = vmatprep.subr.bf16.mxu0 0
    %537 = vmatpush1.bf16.msra.mxu0 0
    %538 = vmatprep.subr.bf16.mxu0 0
    %539 = vmatpush1.bf16.msra.mxu0 0
    %540 = vmatprep.subr.bf16.mxu0 0
    %541 = vmatpush1.bf16.msra.mxu0 %v501
    %542 = vmatprep.subr.bf16.mxu0 0
    %543 = vmatpush1.bf16.msra.mxu0 %v500
    %544 = vmatprep.subr.bf16.mxu0 0
    %545 = vmatpush2.bf16.msra.mxu0 0
    %546 = vmatprep.subr.bf16.mxu0 0
    %547 = vmatpush2.bf16.msra.mxu0 0
    %548 = vmatprep.subr.bf16.mxu0 0
    %549 = vmatpush2.bf16.msra.mxu0 0
    %550 = vmatprep.subr.bf16.mxu0 0
    %551 = vmatpush2.bf16.msra.mxu0 0
    %552 = vmatprep.subr.bf16.mxu0 0
    %553 = vmatpush2.bf16.msra.mxu0 0
    %554 = vmatprep.subr.bf16.mxu0 0
    %555 = vmatpush2.bf16.msra.mxu0 0
    %556 = vmatprep.subr.bf16.mxu0 0
    %557 = vmatpush2.bf16.msra.mxu0 0
    %558 = vmatprep.subr.bf16.mxu0 0
    %559 = vmatpush2.bf16.msra.mxu0 0
    %560 = vmatprep.mubr.bf16.mxu0 0
    %561 = vmatmul.mubr.bf16.gmra.mxu0 %v505
    %v562 = vpop.f32.mrf.mxu0
    %v563 = vadd.f32 %v390, %v562
    %v564 = vpop.f32.mrf.mxu0
    %v565 = vpop.f32.mrf.mxu0
    %v566 = vadd.f32 %v393, %v565
    %v567 = vpop.f32.mrf.mxu0
    %568 = vmatprep.mubr.bf16.mxu0 0
    %569 = vmatmul.mubr.bf16.gmra.mxu0 %v508
    %v570 = vpop.f32.mrf.mxu0
    %v571 = vadd.f32 %v398, %v570
    %v572 = vpop.f32.mrf.mxu0
    %v573 = vpop.f32.mrf.mxu0
    %v574 = vadd.f32 %v401, %v573
    %v575 = vpop.f32.mrf.mxu0
    %576 = vmatprep.mubr.bf16.mxu0 0
    %577 = vmatmul.mubr.bf16.gmra.mxu0 %v511
    %v578 = vpop.f32.mrf.mxu0
    %v579 = vadd.f32 %v406, %v578
    %v580 = vpop.f32.mrf.mxu0
    %v581 = vpop.f32.mrf.mxu0
    %v582 = vadd.f32 %v409, %v581
    %v583 = vpop.f32.mrf.mxu0
    %584 = vmatprep.mubr.bf16.mxu0 0
    %585 = vmatmul.mubr.bf16.gmra.mxu0 %v514
    %v586 = vpop.f32.mrf.mxu0
    %v587 = vadd.f32 %v414, %v586
    %v588 = vpop.f32.mrf.mxu0
    %v589 = vpop.f32.mrf.mxu0
    %v590 = vadd.f32 %v417, %v589
    %v591 = vpop.f32.mrf.mxu0
    %592 = vmatprep.mubr.bf16.mxu0 0
    %593 = vmatmul.mubr.bf16.gmra.mxu0 %v517
    %v594 = vpop.f32.mrf.mxu0
    %v595 = vadd.f32 %v422, %v594
    %v596 = vpop.f32.mrf.mxu0
    %v597 = vpop.f32.mrf.mxu0
    %v598 = vadd.f32 %v425, %v597
    %v599 = vpop.f32.mrf.mxu0
    %600 = vmatprep.mubr.bf16.mxu0 0
    %601 = vmatmul.mubr.bf16.gmra.mxu0 %v520
    %v602 = vpop.f32.mrf.mxu0
    %v603 = vadd.f32 %v430, %v602
    %v604 = vpop.f32.mrf.mxu0
    %v605 = vpop.f32.mrf.mxu0
    %v606 = vadd.f32 %v433, %v605
    %v607 = vpop.f32.mrf.mxu0
    %608 = vmatprep.mubr.bf16.mxu0 0
    %609 = vmatmul.mubr.bf16.gmra.mxu0 %v523
    %v610 = vpop.f32.mrf.mxu0
    %v611 = vadd.f32 %v438, %v610
    %v612 = vpop.f32.mrf.mxu0
    %v613 = vpop.f32.mrf.mxu0
    %v614 = vadd.f32 %v441, %v613
    %v615 = vpop.f32.mrf.mxu0
    %616 = vmatprep.mubr.bf16.mxu0 0
    %617 = vmatmul.mubr.bf16.gmra.mxu0 %v526
    %v618 = vpop.f32.mrf.mxu0
    %v619 = vadd.f32 %v446, %v618
    %v620 = vpop.f32.mrf.mxu0
    %v621 = vpop.f32.mrf.mxu0
    %v622 = vadd.f32 %v449, %v621
    %v623 = vpop.f32.mrf.mxu0
    %624 = vdwg.mxu0
    %v625 = vld [vmem:[#allocation2] sm:$0xe]
    %v626 = vld [vmem:[#allocation2 + $0xc] sm:$0xe]
    %v627 = vld [vmem:[#allocation2 + $0x18] sm:$0xe]
    %v628 = vld [vmem:[#allocation2 + $0x24] sm:$0xe]
    %v629 = vld [vmem:[#allocation2 + $0x30] sm:$0xe]
    %v630 = vld [vmem:[#allocation2 + $0x3c] sm:$0xe]
    %v631 = vld [vmem:[#allocation2 + $0x48] sm:$0xe]
    %v632 = vld [vmem:[#allocation2 + $0x54] sm:$0xe]
    %vm649 = vcmask 1042432
    %vm650 = vcmask 1046532
    %vm651 = vmor %vm649, %vm650
    %v652 = vrot.slane %v625, 5
    %v653 = vrot.slane %v652, 4
    %v654 = vrot.slane %v67, 5
    %v655 = vsel %vm651, %v653, %v654
    %v656 = vrot.slane %v654, 4
    %v657 = vrot.slane %v86, 5
    %v658 = vsel %vm651, %v656, %v657
    %v659 = vrot.slane %v626, 5
    %v660 = vrot.slane %v659, 4
    %v661 = vrot.slane %v69, 5
    %v662 = vsel %vm651, %v660, %v661
    %v663 = vrot.slane %v661, 4
    %v664 = vrot.slane %v87, 5
    %v665 = vsel %vm651, %v663, %v664
    %v666 = vrot.slane %v627, 5
    %v667 = vrot.slane %v666, 4
    %v668 = vrot.slane %v71, 5
    %v669 = vsel %vm651, %v667, %v668
    %v670 = vrot.slane %v668, 4
    %v671 = vrot.slane %v88, 5
    %v672 = vsel %vm651, %v670, %v671
    %v673 = vrot.slane %v628, 5
    %v674 = vrot.slane %v673, 4
    %v675 = vrot.slane %v73, 5
    %v676 = vsel %vm651, %v674, %v675
    %v677 = vrot.slane %v675, 4
    %v678 = vrot.slane %v89, 5
    %v679 = vsel %vm651, %v677, %v678
    %v680 = vrot.slane %v629, 5
    %v681 = vrot.slane %v680, 4
    %v682 = vrot.slane %v75, 5
    %v683 = vsel %vm651, %v681, %v682
    %v684 = vrot.slane %v682, 4
    %v685 = vrot.slane %v90, 5
    %v686 = vsel %vm651, %v684, %v685
    %v687 = vrot.slane %v630, 5
    %v688 = vrot.slane %v687, 4
    %v689 = vrot.slane %v77, 5
    %v690 = vsel %vm651, %v688, %v689
    %v691 = vrot.slane %v689, 4
    %v692 = vrot.slane %v91, 5
    %v693 = vsel %vm651, %v691, %v692
    %v694 = vrot.slane %v631, 5
    %v695 = vrot.slane %v694, 4
    %v696 = vrot.slane %v79, 5
    %v697 = vsel %vm651, %v695, %v696
    %v698 = vrot.slane %v696, 4
    %v699 = vrot.slane %v92, 5
    %v700 = vsel %vm651, %v698, %v699
    %v701 = vrot.slane %v632, 5
    %v702 = vrot.slane %v701, 4
    %v703 = vrot.slane %v81, 5
    %v704 = vsel %vm651, %v702, %v703
    %v705 = vrot.slane %v703, 4
    %v706 = vrot.slane %v93, 5
    %v707 = vsel %vm651, %v705, %v706
    %s708 = scalar_lea.vmem [#allocation5], 32
    %v709 = vld [vmem:[%s708] sm:$0xf]
    %v710 = vld [vmem:[%s708 + $0x4] sm:$0xf]
    %v711 = vld [vmem:[%s708 + $0x8] sm:$0xf]
    %v712 = vld [vmem:[%s708 + $0xc] sm:$0xf]
    %v713 = vunpack.c.l.b16 %v655
    %v714 = vunpack.c.l.b16 %v658
    %v715 = vunpack.c.l.b16 %v662
    %v716 = vunpack.c.l.b16 %v665
    %v717 = vunpack.c.l.b16 %v669
    %v718 = vunpack.c.l.b16 %v672
    %v719 = vunpack.c.l.b16 %v676
    %v720 = vunpack.c.l.b16 %v679
    %v721 = vunpack.c.l.b16 %v683
    %v722 = vunpack.c.l.b16 %v686
    %v723 = vunpack.c.l.b16 %v690
    %v724 = vunpack.c.l.b16 %v693
    %v725 = vunpack.c.l.b16 %v697
    %v726 = vunpack.c.l.b16 %v700
    %v727 = vunpack.c.l.b16 %v704
    %v728 = vunpack.c.l.b16 %v707
    %v729 = vpack.c.b16 %v714, %v713
    %v730 = vpack.c.b16 %v716, %v715
    %v731 = vpack.c.b16 %v718, %v717
    %v732 = vpack.c.b16 %v720, %v719
    %v733 = vpack.c.b16 %v722, %v721
    %v734 = vpack.c.b16 %v724, %v723
    %v735 = vpack.c.b16 %v726, %v725
    %v736 = vpack.c.b16 %v728, %v727
    %v741 = vunpack.c.l.b16 %v709
    %v742 = vunpack.c.l.b16 %v710
    %v743 = vunpack.c.l.b16 %v711
    %v744 = vunpack.c.l.b16 %v712
    %v745 = vpack.c.b16 %v742, %v741
    %v746 = vpack.c.b16 %v744, %v743
    %v750 = vsel %vm330, %v729, 0
    %v753 = vsel %vm330, %v730, 0
    %v756 = vsel %vm330, %v731, 0
    %v759 = vsel %vm330, %v732, 0
    %v762 = vsel %vm330, %v733, 0
    %v765 = vsel %vm330, %v734, 0
    %v768 = vsel %vm330, %v735, 0
    %v771 = vsel %vm330, %v736, 0
    %773 = vmatprep.subr.bf16.mxu0 0
    %774 = vmatpush1.bf16.msra.mxu0 0
    %775 = vmatprep.subr.bf16.mxu0 0
    %776 = vmatpush1.bf16.msra.mxu0 0
    %777 = vmatprep.subr.bf16.mxu0 0
    %778 = vmatpush1.bf16.msra.mxu0 0
    %779 = vmatprep.subr.bf16.mxu0 0
    %780 = vmatpush1.bf16.msra.mxu0 0
    %781 = vmatprep.subr.bf16.mxu0 0
    %782 = vmatpush1.bf16.msra.mxu0 0
    %783 = vmatprep.subr.bf16.mxu0 0
    %784 = vmatpush1.bf16.msra.mxu0 0
    %785 = vmatprep.subr.bf16.mxu0 0
    %786 = vmatpush1.bf16.msra.mxu0 %v746
    %787 = vmatprep.subr.bf16.mxu0 0
    %788 = vmatpush1.bf16.msra.mxu0 %v745
    %789 = vmatprep.subr.bf16.mxu0 0
    %790 = vmatpush2.bf16.msra.mxu0 0
    %791 = vmatprep.subr.bf16.mxu0 0
    %792 = vmatpush2.bf16.msra.mxu0 0
    %793 = vmatprep.subr.bf16.mxu0 0
    %794 = vmatpush2.bf16.msra.mxu0 0
    %795 = vmatprep.subr.bf16.mxu0 0
    %796 = vmatpush2.bf16.msra.mxu0 0
    %797 = vmatprep.subr.bf16.mxu0 0
    %798 = vmatpush2.bf16.msra.mxu0 0
    %799 = vmatprep.subr.bf16.mxu0 0
    %800 = vmatpush2.bf16.msra.mxu0 0
    %801 = vmatprep.subr.bf16.mxu0 0
    %802 = vmatpush2.bf16.msra.mxu0 0
    %803 = vmatprep.subr.bf16.mxu0 0
    %804 = vmatpush2.bf16.msra.mxu0 0
    %805 = vmatprep.mubr.bf16.mxu0 0
    %806 = vmatmul.mubr.bf16.gmra.mxu0 %v750
    %v807 = vpop.f32.mrf.mxu0
    %v808 = vadd.f32 0.0, %v807
    %v809 = vpop.f32.mrf.mxu0
    %v810 = vpop.f32.mrf.mxu0
    %v811 = vadd.f32 0.0, %v810
    %v812 = vpop.f32.mrf.mxu0
    %813 = vmatprep.mubr.bf16.mxu0 0
    %814 = vmatmul.mubr.bf16.gmra.mxu0 %v753
    %v815 = vpop.f32.mrf.mxu0
    %v816 = vadd.f32 0.0, %v815
    %v817 = vpop.f32.mrf.mxu0
    %v818 = vpop.f32.mrf.mxu0
    %v819 = vadd.f32 0.0, %v818
    %v820 = vpop.f32.mrf.mxu0
    %821 = vmatprep.mubr.bf16.mxu0 0
    %822 = vmatmul.mubr.bf16.gmra.mxu0 %v756
    %v823 = vpop.f32.mrf.mxu0
    %v824 = vadd.f32 0.0, %v823
    %v825 = vpop.f32.mrf.mxu0
    %v826 = vpop.f32.mrf.mxu0
    %v827 = vadd.f32 0.0, %v826
    %v828 = vpop.f32.mrf.mxu0
    %829 = vmatprep.mubr.bf16.mxu0 0
    %830 = vmatmul.mubr.bf16.gmra.mxu0 %v759
    %v831 = vpop.f32.mrf.mxu0
    %v832 = vadd.f32 0.0, %v831
    %v833 = vpop.f32.mrf.mxu0
    %v834 = vpop.f32.mrf.mxu0
    %v835 = vadd.f32 0.0, %v834
    %v836 = vpop.f32.mrf.mxu0
    %837 = vmatprep.mubr.bf16.mxu0 0
    %838 = vmatmul.mubr.bf16.gmra.mxu0 %v762
    %v839 = vpop.f32.mrf.mxu0
    %v840 = vadd.f32 0.0, %v839
    %v841 = vpop.f32.mrf.mxu0
    %v842 = vpop.f32.mrf.mxu0
    %v843 = vadd.f32 0.0, %v842
    %v844 = vpop.f32.mrf.mxu0
    %845 = vmatprep.mubr.bf16.mxu0 0
    %846 = vmatmul.mubr.bf16.gmra.mxu0 %v765
    %v847 = vpop.f32.mrf.mxu0
    %v848 = vadd.f32 0.0, %v847
    %v849 = vpop.f32.mrf.mxu0
    %v850 = vpop.f32.mrf.mxu0
    %v851 = vadd.f32 0.0, %v850
    %v852 = vpop.f32.mrf.mxu0
    %853 = vmatprep.mubr.bf16.mxu0 0
    %854 = vmatmul.mubr.bf16.gmra.mxu0 %v768
    %v855 = vpop.f32.mrf.mxu0
    %v856 = vadd.f32 0.0, %v855
    %v857 = vpop.f32.mrf.mxu0
    %v858 = vpop.f32.mrf.mxu0
    %v859 = vadd.f32 0.0, %v858
    %v860 = vpop.f32.mrf.mxu0
    %861 = vmatprep.mubr.bf16.mxu0 0
    %862 = vmatmul.mubr.bf16.gmra.mxu0 %v771
    %v863 = vpop.f32.mrf.mxu0
    %v864 = vadd.f32 0.0, %v863
    %v865 = vpop.f32.mrf.mxu0
    %v866 = vpop.f32.mrf.mxu0
    %v867 = vadd.f32 0.0, %v866
    %v868 = vpop.f32.mrf.mxu0
    %869 = vdwg.mxu0
    %v870 = vadd.f32 %v563, %v808
    %v871 = vadd.f32 %v566, %v811
    %v872 = vadd.f32 %v571, %v816
    %v873 = vadd.f32 %v574, %v819
    %v874 = vadd.f32 %v579, %v824
    %v875 = vadd.f32 %v582, %v827
    %v876 = vadd.f32 %v587, %v832
    %v877 = vadd.f32 %v590, %v835
    %v878 = vadd.f32 %v595, %v840
    %v879 = vadd.f32 %v598, %v843
    %v880 = vadd.f32 %v603, %v848
    %v881 = vadd.f32 %v606, %v851
    %v882 = vadd.f32 %v611, %v856
    %v883 = vadd.f32 %v614, %v859
    %v884 = vadd.f32 %v619, %v864
    %v885 = vadd.f32 %v622, %v867
    %v886 = vlaneseq
    %v887 = vshrl.u32 %v886, 7
    %v888 = vadd.s32 %v887, 8
    %vm889 = vcmp.lt.s32.totalorder %v887, 14
    %vm890 = vcmp.lt.s32.totalorder %v888, 14
    %v891 = vsel %vm889, 0.0, -1e+30
    %v892 = vsel %vm890, 0.0, -1e+30
    %v893 = vadd.f32 %v870, %v891
    %v894 = vadd.f32 %v871, %v892
    %v895 = vadd.f32 %v872, %v891
    %v896 = vadd.f32 %v873, %v892
    %v897 = vadd.f32 %v874, %v891
    %v898 = vadd.f32 %v875, %v892
    %v899 = vadd.f32 %v876, %v891
    %v900 = vadd.f32 %v877, %v892
    %v901 = vadd.f32 %v878, %v891
    %v902 = vadd.f32 %v879, %v892
    %v903 = vadd.f32 %v880, %v891
    %v904 = vadd.f32 %v881, %v892
    %v905 = vadd.f32 %v882, %v891
    %v906 = vadd.f32 %v883, %v892
    %v907 = vadd.f32 %v884, %v891
    %v908 = vadd.f32 %v885, %v892
    %v909 = vmax.f32 %v893, %v894
    %v910 = vrot.slane %v909, 4
    %v911 = vmax.f32 %v909, %v910
    %v912 = vrot.slane %v911, 2
    %v913 = vmax.f32 %v911, %v912
    %v914 = vrot.slane %v913, 1
    %v915 = vmax.f32 %v913, %v914
    %v916 = vmax.f32 %v895, %v896
    %v917 = vrot.slane %v916, 4
    %v918 = vmax.f32 %v916, %v917
    %v919 = vrot.slane %v918, 2
    %v920 = vmax.f32 %v918, %v919
    %v921 = vrot.slane %v920, 1
    %v922 = vmax.f32 %v920, %v921
    %v923 = vmax.f32 %v897, %v898
    %v924 = vrot.slane %v923, 4
    %v925 = vmax.f32 %v923, %v924
    %v926 = vrot.slane %v925, 2
    %v927 = vmax.f32 %v925, %v926
    %v928 = vrot.slane %v927, 1
    %v929 = vmax.f32 %v927, %v928
    %v930 = vmax.f32 %v899, %v900
    %v931 = vrot.slane %v930, 4
    %v932 = vmax.f32 %v930, %v931
    %v933 = vrot.slane %v932, 2
    %v934 = vmax.f32 %v932, %v933
    %v935 = vrot.slane %v934, 1
    %v936 = vmax.f32 %v934, %v935
    %v937 = vmax.f32 %v901, %v902
    %v938 = vrot.slane %v937, 4
    %v939 = vmax.f32 %v937, %v938
    %v940 = vrot.slane %v939, 2
    %v941 = vmax.f32 %v939, %v940
    %v942 = vrot.slane %v941, 1
    %v943 = vmax.f32 %v941, %v942
    %v944 = vmax.f32 %v903, %v904
    %v945 = vrot.slane %v944, 4
    %v946 = vmax.f32 %v944, %v945
    %v947 = vrot.slane %v946, 2
    %v948 = vmax.f32 %v946, %v947
    %v949 = vrot.slane %v948, 1
    %v950 = vmax.f32 %v948, %v949
    %v951 = vmax.f32 %v905, %v906
    %v952 = vrot.slane %v951, 4
    %v953 = vmax.f32 %v951, %v952
    %v954 = vrot.slane %v953, 2
    %v955 = vmax.f32 %v953, %v954
    %v956 = vrot.slane %v955, 1
    %v957 = vmax.f32 %v955, %v956
    %v958 = vmax.f32 %v907, %v908
    %v959 = vrot.slane %v958, 4
    %v960 = vmax.f32 %v958, %v959
    %v961 = vrot.slane %v960, 2
    %v962 = vmax.f32 %v960, %v961
    %v963 = vrot.slane %v962, 1
    %v964 = vmax.f32 %v962, %v963
    %v965 = vld [vmem:[%s2] sm:$0x1]
    %v967 = vlaneseq
    %v968 = vshrl.u32 %v967, 7
    %v969 = vsub.s32 0, %v968
    %v970 = vrot.slane %v965, %v969
    %v972 = vadd.f32 %v915, %v970
    %v973 = vadd.f32 %v922, %v970
    %v974 = vadd.f32 %v929, %v970
    %v975 = vadd.f32 %v936, %v970
    %v976 = vadd.f32 %v943, %v970
    %v977 = vadd.f32 %v950, %v970
    %v978 = vadd.f32 %v957, %v970
    %v979 = vadd.f32 %v964, %v970
    %v980 = vmax.f32 %v972, 0.0
    %v981 = vmax.f32 %v973, 0.0
    %v982 = vmax.f32 %v974, 0.0
    %v983 = vmax.f32 %v975, 0.0
    %v984 = vmax.f32 %v976, 0.0
    %v985 = vmax.f32 %v977, 0.0
    %v986 = vmax.f32 %v978, 0.0
    %v987 = vmax.f32 %v979, 0.0
    %v996 = vrot.slane %v981, 7
    %vm997 = vcmask 1041409
    %v998 = vsel %vm997, %v996, %v980
    %v999 = vrot.slane %v982, 6
    %vm1000 = vcmask 1042434
    %v1001 = vsel %vm1000, %v999, %v998
    %v1002 = vrot.slane %v983, 5
    %vm1003 = vcmask 1043459
    %v1004 = vsel %vm1003, %v1002, %v1001
    %v1005 = vrot.slane %v984, 4
    %vm1006 = vcmask 1044484
    %v1007 = vsel %vm1006, %v1005, %v1004
    %v1008 = vrot.slane %v985, 3
    %vm1009 = vcmask 1045509
    %v1010 = vsel %vm1009, %v1008, %v1007
    %v1011 = vrot.slane %v986, 2
    %vm1012 = vcmask 1046534
    %v1013 = vsel %vm1012, %v1011, %v1010
    %v1014 = vrot.slane %v987, 1
    %vm1015 = vcmask 1047559
    %v1016 = vsel %vm1015, %v1014, %v1013
    %1018 = vst [vmem:[#allocation9] sm:$0xff] %v1016
    %v1019 = vpack.c.bf16 %v980, %v980
    %v1020 = vpack.c.bf16 %v981, %v981
    %v1021 = vpack.c.bf16 %v982, %v982
    %v1022 = vpack.c.bf16 %v983, %v983
    %v1023 = vpack.c.bf16 %v984, %v984
    %v1024 = vpack.c.bf16 %v985, %v985
    %v1025 = vpack.c.bf16 %v986, %v986
    %v1026 = vpack.c.bf16 %v987, %v987
    %v1027 = vld [vmem:[#allocation7] sm:$0xf]
    %v1028 = vld [vmem:[#allocation7 + $0x4] sm:$0xf]
    %v1029 = vld [vmem:[#allocation7 + $0x8] sm:$0xf]
    %v1030 = vld [vmem:[#allocation7 + $0xc] sm:$0xf]
    %v1031 = vld [vmem:[#allocation7 + $0x10] sm:$0xf]
    %v1032 = vld [vmem:[#allocation7 + $0x14] sm:$0xf]
    %v1033 = vld [vmem:[#allocation7 + $0x18] sm:$0xf]
    %v1034 = vld [vmem:[#allocation7 + $0x1c] sm:$0xf]
    %v1035 = vld [vmem:[#allocation7 + $0x20] sm:$0xf]
    %v1036 = vld [vmem:[#allocation7 + $0x24] sm:$0xf]
    %v1037 = vld [vmem:[#allocation7 + $0x28] sm:$0xf]
    %v1038 = vld [vmem:[#allocation7 + $0x2c] sm:$0xf]
    %v1039 = vld [vmem:[#allocation7 + $0x30] sm:$0xf]
    %v1040 = vld [vmem:[#allocation7 + $0x34] sm:$0xf]
    %v1041 = vld [vmem:[#allocation7 + $0x38] sm:$0xf]
    %v1042 = vld [vmem:[#allocation7 + $0x3c] sm:$0xf]
    %v1043 = vld [vmem:[%s4] sm:$0x1]
    %v1045 = vlaneseq
    %v1046 = vshrl.u32 %v1045, 7
    %v1047 = vsub.s32 0, %v1046
    %v1048 = vrot.slane %v1043, %v1047
    %v1058 = vunpack.c.l.b16 %v1019
    %v1059 = vunpack.c.l.b16 %v1020
    %v1060 = vunpack.c.l.b16 %v1021
    %v1061 = vunpack.c.l.b16 %v1022
    %v1062 = vunpack.c.l.b16 %v1023
    %v1063 = vunpack.c.l.b16 %v1024
    %v1064 = vunpack.c.l.b16 %v1025
    %v1065 = vunpack.c.l.b16 %v1026
    %v1066 = vrot.slane %v1059, 7
    %v1067 = vsel %vm997, %v1066, %v1058
    %v1068 = vrot.slane %v1060, 6
    %v1069 = vsel %vm1000, %v1068, %v1067
    %v1070 = vrot.slane %v1061, 5
    %v1071 = vsel %vm1003, %v1070, %v1069
    %v1072 = vrot.slane %v1062, 4
    %v1073 = vsel %vm1006, %v1072, %v1071
    %v1074 = vrot.slane %v1063, 3
    %v1075 = vsel %vm1009, %v1074, %v1073
    %v1076 = vrot.slane %v1064, 2
    %v1077 = vsel %vm1012, %v1076, %v1075
    %v1078 = vrot.slane %v1065, 1
    %v1079 = vsel %vm1015, %v1078, %v1077
    %v1080 = vpack.c.b16 %v1079, %v1079
    %v1098 = vunpack.c.l.b16 %v1027
    %v1099 = vunpack.c.l.b16 %v1028
    %v1100 = vunpack.c.l.b16 %v1029
    %v1101 = vunpack.c.l.b16 %v1030
    %v1102 = vunpack.c.l.b16 %v1031
    %v1103 = vunpack.c.l.b16 %v1032
    %v1104 = vunpack.c.l.b16 %v1033
    %v1105 = vunpack.c.l.b16 %v1034
    %v1106 = vunpack.c.l.b16 %v1035
    %v1107 = vunpack.c.l.b16 %v1036
    %v1108 = vunpack.c.l.b16 %v1037
    %v1109 = vunpack.c.l.b16 %v1038
    %v1110 = vunpack.c.l.b16 %v1039
    %v1111 = vunpack.c.l.b16 %v1040
    %v1112 = vunpack.c.l.b16 %v1041
    %v1113 = vunpack.c.l.b16 %v1042
    %v1114 = vpack.c.b16 %v1099, %v1098
    %v1115 = vpack.c.b16 %v1101, %v1100
    %v1116 = vpack.c.b16 %v1103, %v1102
    %v1117 = vpack.c.b16 %v1105, %v1104
    %v1118 = vpack.c.b16 %v1107, %v1106
    %v1119 = vpack.c.b16 %v1109, %v1108
    %v1120 = vpack.c.b16 %v1111, %v1110
    %v1121 = vpack.c.b16 %v1113, %v1112
    %1130 = vmatprep.subr.bf16.mxu0 0
    %1131 = vmatpush1.bf16.msra.mxu0 %v1121
    %1132 = vmatprep.subr.bf16.mxu0 0
    %1133 = vmatpush1.bf16.msra.mxu0 %v1120
    %1134 = vmatprep.subr.bf16.mxu0 0
    %1135 = vmatpush1.bf16.msra.mxu0 %v1119
    %1136 = vmatprep.subr.bf16.mxu0 0
    %1137 = vmatpush1.bf16.msra.mxu0 %v1118
    %1138 = vmatprep.subr.bf16.mxu0 0
    %1139 = vmatpush1.bf16.msra.mxu0 %v1117
    %1140 = vmatprep.subr.bf16.mxu0 0
    %1141 = vmatpush1.bf16.msra.mxu0 %v1116
    %1142 = vmatprep.subr.bf16.mxu0 0
    %1143 = vmatpush1.bf16.msra.mxu0 %v1115
    %1144 = vmatprep.subr.bf16.mxu0 0
    %1145 = vmatpush1.bf16.msra.mxu0 %v1114
    %1146 = vmatprep.subr.bf16.mxu0 0
    %1147 = vmatpush2.bf16.msra.mxu0 0
    %1148 = vmatprep.subr.bf16.mxu0 0
    %1149 = vmatpush2.bf16.msra.mxu0 0
    %1150 = vmatprep.subr.bf16.mxu0 0
    %1151 = vmatpush2.bf16.msra.mxu0 0
    %1152 = vmatprep.subr.bf16.mxu0 0
    %1153 = vmatpush2.bf16.msra.mxu0 0
    %1154 = vmatprep.subr.bf16.mxu0 0
    %1155 = vmatpush2.bf16.msra.mxu0 0
    %1156 = vmatprep.subr.bf16.mxu0 0
    %1157 = vmatpush2.bf16.msra.mxu0 0
    %1158 = vmatprep.subr.bf16.mxu0 0
    %1159 = vmatpush2.bf16.msra.mxu0 0
    %1160 = vmatprep.subr.bf16.mxu0 0
    %1161 = vmatpush2.bf16.msra.mxu0 0
    %1162 = vmatprep.mubr.bf16.mxu0 0
    %1163 = vmatmul.mubr.bf16.gmra.mxu0 %v1080
    %v1164 = vpop.f32.mrf.mxu0
    %v1165 = vadd.f32 %v1048, %v1164
    %v1166 = vpop.f32.mrf.mxu0
    %v1167 = vpop.f32.mrf.mxu0
    %v1168 = vpop.f32.mrf.mxu0
    %1169 = vdwg.mxu0
    %1170 = vmax.xlane.f32.xlu0 %v1165
    %v1171 = vpop.xlane.xlu0 %1170
    %v1172 = vsub.f32 %v1165, %v1171
    %v1173 = vmul.f32 %v1172, 1.442695
    %v1174 = vpow.pop %v1173
    %1175 = vadd.xlane.f32.xlu0 %v1174
    %v1176 = vpop.xlane.xlu0 %1175
    %v1177 = vrcp.pop %v1176
    %v1178 = vmul.f32 %v1174, %v1177
    %1179 = vst [vmem:[#allocation8] sm:$0xff] %v1178
    // Predicated region
    $region34: #{tpu_custom_call.1} parent=1 // pred_check
      _
    $region35: #{tpu_custom_call.1} parent=1 // pred_check_branch
      %1181 = sbr.rel (0) target = $region37
    $region36: #{tpu_custom_call.1} parent=1 // pred_region
      %s1183 = ssub.s32 128, 128
      %1184 = vsyncadd [#allocation4], %s1183
      %s1186 = sshll.u32 [#allocation8], 4
      %s1187 = int_to_ptr.vmem [resolvable:$true] %s1186
      %1189 = dma.vmem_to_hbm [thread:$0]  %s1187, 128, %s5, [#allocation4]
    $region37: #{tpu_custom_call.1} parent=1 // pred_fallthru
      _
    // Predicated region
    $region38: #{tpu_custom_call.1} parent=1 // pred_check
      _
    $region39: #{tpu_custom_call.1} parent=1 // pred_check_branch
      %1191 = sbr.rel (0) target = $region41
    $region40: #{tpu_custom_call.1} parent=1 // pred_region
      %s1193 = ssub.s32 128, 128
      %1194 = vsyncadd [#allocation10], %s1193
      %s1196 = sshll.u32 [#allocation9], 4
      %s1197 = int_to_ptr.vmem [resolvable:$true] %s1196
      %1199 = dma.vmem_to_hbm [thread:$0]  %s1197, 128, %s6, [#allocation10]
    $region41: #{tpu_custom_call.1} parent=1 // pred_fallthru
      _
    // Predicated region
    $region42: #{tpu_custom_call.1} parent=1 // pred_check
      _
    $region43: #{tpu_custom_call.1} parent=1 // pred_check_branch
      %1201 = sbr.rel (0) target = $region45
    $region44: #{tpu_custom_call.1} parent=1 // pred_region
      %1202 = dma.done [#allocation4], 128
    $region45: #{tpu_custom_call.1} parent=1 // pred_fallthru
      _
    // Predicated region
    $region46: #{tpu_custom_call.1} parent=1 // pred_check
      _
    $region47: #{tpu_custom_call.1} parent=1 // pred_check_branch
      %1204 = sbr.rel (0) target = $region49
    $region48: #{tpu_custom_call.1} parent=1 // pred_region
      %1205 = dma.done [#allocation10], 128
    $region49: #{tpu_custom_call.1} parent=1 // pred_fallthru
      _
    %1206 = vsyncpa [#allocation3], 1
    %1207 = vsyncpa [#allocation6], 1
    %1208 = vsyncpa [#allocation4], 1
    %1209 = vsyncpa [#allocation10], 1

</llo_original>
